<compile_context>
chip_gen: v5e
topology: v5e:2x2
jax: 0.10.0
libtpu: 0.0.40
codegen_flags: <defaults>
</compile_context>

<pallas_src>
import functools
import math

import jax
import jax.numpy as jnp
from jax.experimental import pallas as pl
from jax.experimental.pallas import tpu as pltpu


# ----------------------------- Pallas kernels ------------------------------

def _matmul_kernel(act, x_ref, w_ref, b_ref, o_ref):
    # bf16 operands, f32 accumulation on the MXU.
    y = jnp.dot(x_ref[...], w_ref[...], preferred_element_type=jnp.float32)
    y = y + b_ref[...]
    if act == "relu":
        y = jnp.maximum(y, 0.0)
    elif act == "softplus":
        y = jnp.maximum(y, 0.0) + jnp.log1p(jnp.exp(-jnp.abs(y)))
    o_ref[...] = y


def pallas_matmul(x, w, b=None, act="none", tm=512):
    """y = act(x @ w + b). x: (M, K); w: (K, N) (stored bf16); b: (N,) f32 or None."""
    M, K = x.shape
    Kw, Nout = w.shape
    assert K == Kw
    x = x.astype(jnp.bfloat16)
    w = w.astype(jnp.bfloat16)
    if b is None:
        b = jnp.zeros((1, Nout), jnp.float32)
    else:
        b = b.reshape(1, Nout).astype(jnp.float32)
    # Row tiling (parallel M axis) keeps the big space-to-depth matmuls
    # pipelined and VMEM-bounded; tiny matmuls collapse to a single 8-row block.
    tm_eff = min(tm, max(8, ((M + 7) // 8) * 8))
    Mp = ((M + tm_eff - 1) // tm_eff) * tm_eff
    if Mp != M:
        x = jnp.pad(x, ((0, Mp - M), (0, 0)))
    y = pl.pallas_call(
        functools.partial(_matmul_kernel, act),
        grid=(Mp // tm_eff,),
        in_specs=[
            pl.BlockSpec((tm_eff, K), lambda i: (i, 0)),
            pl.BlockSpec((K, Nout), lambda i: (0, 0)),
            pl.BlockSpec((1, Nout), lambda i: (0, 0)),
        ],
        out_specs=pl.BlockSpec((tm_eff, Nout), lambda i: (i, 0)),
        out_shape=jax.ShapeDtypeStruct((Mp, Nout), jnp.float32),
        compiler_params=pltpu.CompilerParams(dimension_semantics=("parallel",)),
    )(x, w, b)
    return y[:M] if Mp != M else y


def _hypanet_kernel(x_ref, w1_ref, b1_ref, w2_ref, b2_ref, w3_ref, b3_ref, o_ref):
    # Conv(2->h) -> ReLU -> Conv(h->h) -> ReLU -> Conv(h->16) -> Softplus, +1e-6
    z = jnp.dot(x_ref[...], w1_ref[...], preferred_element_type=jnp.float32) + b1_ref[...]
    z = jnp.maximum(z, 0.0)
    z = jnp.dot(z.astype(jnp.bfloat16), w2_ref[...],
                preferred_element_type=jnp.float32) + b2_ref[...]
    z = jnp.maximum(z, 0.0)
    z = jnp.dot(z.astype(jnp.bfloat16), w3_ref[...],
                preferred_element_type=jnp.float32) + b3_ref[...]
    z = jnp.maximum(z, 0.0) + jnp.log1p(jnp.exp(-jnp.abs(z)))     # softplus
    o_ref[...] = z + 1e-6


def hypanet(hp, sigma, sf):
    # All three 1x1-conv layers fused into a single pallas_call.
    N = sigma.shape[0]
    inp = jnp.concatenate(
        [sigma.reshape(N, 1), jnp.full((N, 1), float(sf), jnp.float32)], axis=1)
    Np = max(8, ((N + 7) // 8) * 8)
    if Np != N:
        inp = jnp.pad(inp, ((0, Np - N), (0, 0)))
    out_nc = hp["w3"].shape[1]
    out = pl.pallas_call(
        _hypanet_kernel,
        out_shape=jax.ShapeDtypeStruct((Np, out_nc), jnp.float32),
    )(inp.astype(jnp.bfloat16),
      hp["w1"], hp["b1"].reshape(1, -1),
      hp["w2"], hp["b2"].reshape(1, -1),
      hp["w3"], hp["b3"].reshape(1, -1))
    return out[:N]                                   # (N, 16)


def _conv3x3_kernel(act, x_ref, w_ref, o_ref):
    _, Ho, Wo, Cout = o_ref.shape
    # 9-tap MXU accumulation; contract Cin directly on the 3-D window slice so
    # no per-tap (Ho*Wo, Cin) flatten / relayout copy is needed.
    acc = jnp.zeros((Ho, Wo, Cout), jnp.float32)
    for kh in range(3):
        for kw in range(3):
            patch = x_ref[0, kh:kh + Ho, kw:kw + Wo, :]          # (Ho, Wo, Cin) bf16
            acc = acc + jax.lax.dot_general(
                patch, w_ref[kh, kw],
                dimension_numbers=(((2,), (0,)), ((), ())),
                preferred_element_type=jnp.float32)
    if act == "relu":
        acc = jnp.maximum(acc, 0.0)
    o_ref[0] = acc


def pallas_conv3x3(x, w, act="none"):
    # x: (N, H, W, Cin) NHWC; w: (3, 3, Cin, Cout); 'same' zero padding, stride 1.
    N, H, W, Cin = x.shape
    Cout = w.shape[-1]
    xp = jnp.pad(x, ((0, 0), (1, 1), (1, 1), (0, 0))).astype(jnp.bfloat16)
    # TODO(synk): for production-size SR images add row tiling (halo blocks) so a
    # single (H+2, W+2, Cin) plane never exceeds v7x's 64 MiB VMEM.
    return pl.pallas_call(
        functools.partial(_conv3x3_kernel, act),
        grid=(N,),
        in_specs=[
            pl.BlockSpec((1, H + 2, W + 2, Cin), lambda n: (n, 0, 0, 0)),
            pl.BlockSpec((3, 3, Cin, Cout), lambda n: (0, 0, 0, 0)),
        ],
        out_specs=pl.BlockSpec((1, H, W, Cout), lambda n: (n, 0, 0, 0)),
        out_shape=jax.ShapeDtypeStruct((N, H, W, Cout), jnp.float32),
        compiler_params=pltpu.CompilerParams(dimension_semantics=("parallel",)),
    )(xp, w.astype(jnp.bfloat16))


def _data_kernel(sf, alpha_ref, fbr_ref, fbi_ref, styr_ref, styi_ref,
                 faxr_ref, faxi_ref, oxr_ref, oxi_ref):
    i = pl.program_id(0)
    a = alpha_ref[i]
    inv_a = 1.0 / a
    fbr = fbr_ref[0]
    fbi = fbi_ref[0]
    styr = styr_ref[0]
    styi = styi_ref[0]
    # FBFy = cmul(conj(FB), FFT(S^T y)) ; FR = FBFy + FFT(alpha * x)
    frr = (fbr * styr + fbi * styi) + faxr_ref[0]
    fri = (fbr * styi - fbi * styr) + faxi_ref[0]
    Hs, Ws = fbr.shape
    hb, wb = Hs // sf, Ws // sf
    # block means over the sf x sf splits of x1 = cmul(FB, FR) and of |FB|^2
    mr = jnp.zeros((hb, wb), jnp.float32)
    mi = jnp.zeros((hb, wb), jnp.float32)
    m2 = jnp.zeros((hb, wb), jnp.float32)
    for p in range(sf):
        for q in range(sf):
            br = fbr[p * hb:(p + 1) * hb, q * wb:(q + 1) * wb]
            bi = fbi[p * hb:(p + 1) * hb, q * wb:(q + 1) * wb]
            rr = frr[p * hb:(p + 1) * hb, q * wb:(q + 1) * wb]
            ri = fri[p * hb:(p + 1) * hb, q * wb:(q + 1) * wb]
            mr = mr + (br * rr - bi * ri)
            mi = mi + (br * ri + bi * rr)
            m2 = m2 + (br * br + bi * bi)
    s = 1.0 / (sf * sf)
    den = m2 * s + a                        # csum(invW, alpha) -> purely real
    rden = pl.reciprocal(den, approx=True)  # EUP reciprocal (real-denominator cdiv)
    iwr = (mr * s) * rden
    iwi = (mi * s) * rden
    # FX = (FR - cmul(conj(FB), tile(invWBR))) / alpha, computed block-wise
    # (no full-size concatenated temporaries).
    for p in range(sf):
        for q in range(sf):
            br = fbr[p * hb:(p + 1) * hb, q * wb:(q + 1) * wb]
            bi = fbi[p * hb:(p + 1) * hb, q * wb:(q + 1) * wb]
            rr = frr[p * hb:(p + 1) * hb, q * wb:(q + 1) * wb]
            ri = fri[p * hb:(p + 1) * hb, q * wb:(q + 1) * wb]
            fcbr = br * iwr + bi * iwi
            fcbi = br * iwi - bi * iwr
            oxr_ref[0, p * hb:(p + 1) * hb, q * wb:(q + 1) * wb] = (rr - fcbr) * inv_a
            oxi_ref[0, p * hb:(p + 1) * hb, q * wb:(q + 1) * wb] = (ri - fcbi) * inv_a


def pallas_datanet(SR_img, FBr, FBi, x_lr, alpha, sf):
    # SR_img: (N,C,Hs,Ws); FBr/FBi: (N,Hs,Ws); x_lr: (N,C,H,W); alpha: (N,1,1,1)
    N, C, Hs, Ws = SR_img.shape
    assert Hs % sf == 0 and Ws % sf == 0
    # STy = zero-fill upsample(x, sf)
    STy = jnp.zeros((N, C, Hs, Ws), jnp.float32).at[:, :, ::sf, ::sf].set(x_lr)
    # TODO(synk): torch.rfft/irfft (onesided=False) have no Pallas equivalent -> jnp.fft in glue.
    FSTy = jnp.fft.fft2(STy)
    FaX = jnp.fft.fft2(alpha * SR_img)
    NC = N * C

    def flat(z):
        return z.reshape(NC, Hs, Ws).astype(jnp.float32)

    alpha_flat = jnp.broadcast_to(alpha.reshape(N, 1), (N, C)).reshape(NC).astype(jnp.float32)

    # FB is shared across channels: index_map i // C avoids replicating the FB
    # planes in HBM and DMA-ing them C times.
    fb_blk = pl.BlockSpec((1, Hs, Ws), lambda i: (i // C, 0, 0))

    def blk():
        return pl.BlockSpec((1, Hs, Ws), lambda i: (i, 0, 0))

    oxr, oxi = pl.pallas_call(
        functools.partial(_data_kernel, sf),
        grid=(NC,),
        in_specs=[pl.BlockSpec(memory_space=pltpu.MemorySpace.SMEM),
                  fb_blk, fb_blk, blk(), blk(), blk(), blk()],
        out_specs=[blk(), blk()],
        out_shape=[jax.ShapeDtypeStruct((NC, Hs, Ws), jnp.float32)] * 2,
        compiler_params=pltpu.CompilerParams(dimension_semantics=("parallel",)),
    )(alpha_flat,
      FBr.astype(jnp.float32), FBi.astype(jnp.float32),
      flat(FSTy.real), flat(FSTy.imag), flat(FaX.real), flat(FaX.imag))
    FX = (oxr + 1j * oxi).reshape(N, C, Hs, Ws)
    return jnp.real(jnp.fft.ifft2(FX)).astype(jnp.float32)


# ------------------------------- sub-modules --------------------------------

def _resblock(x, pair):
    # TODO(synk): act_mode='BR' BatchNorm is not reproduced; 'CRC' (conv-ReLU-conv) ResBlock used.
    w1, w2 = pair
    r = pallas_conv3x3(x, w1, act="relu")
    r = pallas_conv3x3(r, w2, act="none")
    return x + r


def _downsample_strideconv(x, w):
    # Conv2d k=2, s=2, bias=False == space-to-depth + tiled Pallas matmul
    N, H, W, C = x.shape
    x = x.reshape(N, H // 2, 2, W // 2, 2, C)
    x = jnp.transpose(x, (0, 1, 3, 2, 4, 5)).reshape(N, H // 2, W // 2, 4 * C)
    Cout = w.shape[1]
    y = pallas_matmul(x.reshape(-1, 4 * C), w)
    return y.reshape(N, H // 2, W // 2, Cout)


def _upsample_convtranspose(x, w):
    # ConvTranspose2d k=2, s=2, bias=False == tiled Pallas matmul + depth-to-space
    N, H, W, C = x.shape
    Cout = w.shape[1] // 4
    y = pallas_matmul(x.reshape(-1, C), w).reshape(N, H, W, 2, 2, Cout)
    return jnp.transpose(y, (0, 1, 3, 2, 4, 5)).reshape(N, 2 * H, 2 * W, Cout)


def resunet(p, x):
    # x: NHWC
    N, H, W, _ = x.shape
    pad_b = (-H) % 8
    pad_r = (-W) % 8
    x = jnp.pad(x, ((0, 0), (0, pad_b), (0, pad_r), (0, 0)), mode="edge")  # ReplicationPad2d
    x1 = pallas_conv3x3(x, p["head"])

    def down(z, blk):
        for pair in blk["res"]:
            z = _resblock(z, pair)
        return _downsample_strideconv(z, blk["down"])

    def up(z, blk):
        z = _upsample_convtranspose(z, blk["up"])
        for pair in blk["res"]:
            z = _resblock(z, pair)
        return z

    x2 = down(x1, p["down1"])
    x3 = down(x2, p["down2"])
    x4 = down(x3, p["down3"])
    xb = x4
    for pair in p["body"]:
        xb = _resblock(xb, pair)
    z = up(xb + x4, p["up3"])
    z = up(z + x3, p["up2"])
    z = up(z + x2, p["up1"])
    z = pallas_conv3x3(z + x1, p["tail"])
    return z[:, :H, :W, :]


def p2o(psf, shape):
    # point-spread function -> optical transfer function (full FFT, not onesided)
    B, C, kh, kw = psf.shape
    assert shape[0] >= kh and shape[1] >= kw, "SR image must be >= PSF size (21x21)"
    otf = jnp.zeros((B, C) + tuple(shape), psf.dtype)
    otf = otf.at[..., :kh, :kw].set(psf)
    otf = jnp.roll(otf, shift=(-(kh // 2), -(kw // 2)), axis=(-2, -1))
    OTF = jnp.fft.fft2(otf)
    dims = jnp.array(psf.shape, jnp.float32)
    n_ops = jnp.sum(dims * jnp.log2(dims))
    imag = jnp.where(jnp.abs(OTF.imag) < n_ops * 2.22e-16, 0.0, OTF.imag)
    return OTF.real, imag


# ------------------------------- full forward -------------------------------

def bldsrnet_forward(params, x, sigma, sf, est_ker_map, n_steps=1, n_iter=1):
    """x: (N, C, H, W) NCHW float32; sigma: (N,1,1,1); est_ker_map: (1, code_len)."""
    N, C, H, W = x.shape
    SR_img = jnp.repeat(jnp.repeat(x, sf, axis=2), sf, axis=3)   # nearest-neighbor upsample
    ab = hypanet(params["h"], sigma, sf)                          # (N, 16)
    Hk = Wk = 21
    for step in range(n_steps):
        # TODO(synk): self.pre / self.ker ('create_model(opt_P/opt_C)') and the
        # pca_matrix.pth PCAEncoder are external / file-based; est_ker_map is a
        # fixed synthetic PCA kernel code held constant across steps.
        b_vec = pallas_matmul(est_ker_map, params["inv_pca"])     # (1, 441); B=1 as in reference (b_check[0])
        b_check = (b_vec[0] + 1.0 / (Hk * Wk)).reshape(N, 1, Hk, Wk)
        FBr, FBi = p2o(b_check, (H * sf, W * sf))
        alpha = ab[:, step].reshape(N, 1, 1, 1)
        SR_img = pallas_datanet(SR_img, FBr[:, 0], FBi[:, 0], x, alpha, sf)
        beta = ab[:, step + n_iter].reshape(N, 1, 1, 1)
        beta_map = jnp.broadcast_to(beta, (N, 1, H * sf, W * sf))
        unet_in = jnp.concatenate([SR_img, beta_map], axis=1)     # (N, 4, Hs, Ws)
        out_nhwc = resunet(params["p"], jnp.transpose(unet_in, (0, 2, 3, 1)))
        SR_img = jnp.transpose(out_nhwc, (0, 3, 1, 2))
    return SR_img


# ------------------------------ parameter init -------------------------------

def init_params(key, h_nc=64, ab_nc=16, nc=(16, 32, 64, 64), nb=1, in_nc=4,
                out_nc=3, code_len=10, ksize=21):
    keys = iter(jax.random.split(key, 64))

    def nrm(shape, scale, dtype=jnp.bfloat16):
        # MXU operands (weights) are stored as bf16 once at init; biases stay f32.
        return (jax.random.normal(next(keys), shape, dtype=jnp.float32) * scale).astype(dtype)

    def conv_w(cin, cout):
        return nrm((3, 3, cin, cout), 0.3 / math.sqrt(9 * cin))

    def res_pair(c):
        return (conv_w(c, c), conv_w(c, c))

    h = dict(
        w1=nrm((2, h_nc), 0.5), b1=nrm((h_nc,), 0.1, jnp.float32),
        w2=nrm((h_nc, h_nc), 0.2 / math.sqrt(h_nc)), b2=nrm((h_nc,), 0.1, jnp.float32),
        w3=nrm((h_nc, ab_nc), 0.2 / math.sqrt(h_nc)), b3=nrm((ab_nc,), 0.1, jnp.float32),
    )
    p = dict(
        head=conv_w(in_nc, nc[0]),
        down1=dict(res=[res_pair(nc[0]) for _ in range(nb)],
                   down=nrm((4 * nc[0], nc[1]), 0.3 / math.sqrt(4 * nc[0]))),
        down2=dict(res=[res_pair(nc[1]) for _ in range(nb)],
                   down=nrm((4 * nc[1], nc[2]), 0.3 / math.sqrt(4 * nc[1]))),
        down3=dict(res=[res_pair(nc[2]) for _ in range(nb)],
                   down=nrm((4 * nc[2], nc[3]), 0.3 / math.sqrt(4 * nc[2]))),
        body=[res_pair(nc[3]) for _ in range(nb)],
        up3=dict(up=nrm((nc[3], 4 * nc[2]), 0.3 / math.sqrt(nc[3])),
                 res=[res_pair(nc[2]) for _ in range(nb)]),
        up2=dict(up=nrm((nc[2], 4 * nc[1]), 0.3 / math.sqrt(nc[2])),
                 res=[res_pair(nc[1]) for _ in range(nb)]),
        up1=dict(up=nrm((nc[1], 4 * nc[0]), 0.3 / math.sqrt(nc[1])),
                 res=[res_pair(nc[0]) for _ in range(nb)]),
        tail=conv_w(nc[0], out_nc),
    )
    inv_pca = nrm((code_len, ksize * ksize), 0.02)
    return dict(h=h, p=p, inv_pca=inv_pca)


# ---------------------------------- driver -----------------------------------

if __name__ == "__main__":
    key = jax.random.PRNGKey(0)
    kp, kx, ks, kk = jax.random.split(key, 4)
    params = init_params(kp)

    # B=1 is required by the reference (b_check[0].view(B,H,W)); H*sf = 32 >= 21
    # so the 21x21 PSF fits the SR image in p2o (this was the previous crash).
    N, C, H, W = 1, 3, 16, 16
    sf = 2
    x = jax.random.uniform(kx, (N, C, H, W), dtype=jnp.float32)
    sigma = jax.random.uniform(ks, (N, 1, 1, 1), dtype=jnp.float32) * 0.1
    est_ker_map = jax.random.normal(kk, (1, 10), dtype=jnp.float32) * 0.1

    out = bldsrnet_forward(params, x, sigma, sf, est_ker_map, n_steps=1, n_iter=1)
    out = jax.block_until_ready(out)
    assert out.shape == (N, 3, H * sf, W * sf)
    assert bool(jnp.all(jnp.isfinite(out)))
    print("KERNEL_OK")
</pallas_src>

<mosaic_0001>
module attributes {stable_mosaic.version = 11 : i64} {
  func.func @_hypanet_kernel(%arg0: memref<8x2xbf16, #tpu.memory_space<vmem>>, %arg1: memref<2x64xbf16, #tpu.memory_space<vmem>>, %arg2: memref<1x64xf32, #tpu.memory_space<vmem>>, %arg3: memref<64x64xbf16, #tpu.memory_space<vmem>>, %arg4: memref<1x64xf32, #tpu.memory_space<vmem>>, %arg5: memref<64x16xbf16, #tpu.memory_space<vmem>>, %arg6: memref<1x16xf32, #tpu.memory_space<vmem>>, %arg7: memref<8x16xf32, #tpu.memory_space<vmem>>) attributes {dimension_semantics = [], scalar_prefetch = 0 : i64, scratch_operands = 0 : i64, tpu.core_type = #tpu.core_type<tc>} {
    %c0 = arith.constant 0 : index
    %c0_0 = arith.constant 0 : index
    %0 = vector.load %arg0[%c0, %c0_0] : memref<8x2xbf16, #tpu.memory_space<vmem>>, vector<8x2xbf16>
    %c0_1 = arith.constant 0 : index
    %c0_2 = arith.constant 0 : index
    %1 = vector.load %arg1[%c0_1, %c0_2] : memref<2x64xbf16, #tpu.memory_space<vmem>>, vector<2x64xbf16>
    %cst = arith.constant dense<0.000000e+00> : vector<8x64xf32>
    %2 = tpu.matmul %0, %1, %cst {dimension_numbers = #tpu.dot_dimension_numbers<[1], [0], [0], [1], [0, 0, 1, 1], [], []>} : vector<8x2xbf16>, vector<2x64xbf16>, vector<8x64xf32> -> vector<8x64xf32>
    %c0_3 = arith.constant 0 : index
    %c0_4 = arith.constant 0 : index
    %3 = vector.load %arg2[%c0_3, %c0_4] : memref<1x64xf32, #tpu.memory_space<vmem>>, vector<1x64xf32>
    %4 = vector.broadcast %3 : vector<1x64xf32> to vector<8x64xf32>
    %5 = arith.addf %2, %4 : vector<8x64xf32>
    %cst_5 = arith.constant 0.000000e+00 : f32
    %6 = vector.broadcast %cst_5 : f32 to vector<8x64xf32>
    %7 = arith.maximumf %5, %6 : vector<8x64xf32>
    %8 = arith.truncf %7 : vector<8x64xf32> to vector<8x64xbf16>
    %c0_6 = arith.constant 0 : index
    %c0_7 = arith.constant 0 : index
    %9 = vector.load %arg3[%c0_6, %c0_7] : memref<64x64xbf16, #tpu.memory_space<vmem>>, vector<64x64xbf16>
    %cst_8 = arith.constant dense<0.000000e+00> : vector<8x64xf32>
    %10 = tpu.matmul %8, %9, %cst_8 {dimension_numbers = #tpu.dot_dimension_numbers<[1], [0], [0], [1], [0, 0, 1, 1], [], []>} : vector<8x64xbf16>, vector<64x64xbf16>, vector<8x64xf32> -> vector<8x64xf32>
    %c0_9 = arith.constant 0 : index
    %c0_10 = arith.constant 0 : index
    %11 = vector.load %arg4[%c0_9, %c0_10] : memref<1x64xf32, #tpu.memory_space<vmem>>, vector<1x64xf32>
    %12 = vector.broadcast %11 : vector<1x64xf32> to vector<8x64xf32>
    %13 = arith.addf %10, %12 : vector<8x64xf32>
    %cst_11 = arith.constant 0.000000e+00 : f32
    %14 = vector.broadcast %cst_11 : f32 to vector<8x64xf32>
    %15 = arith.maximumf %13, %14 : vector<8x64xf32>
    %16 = arith.truncf %15 : vector<8x64xf32> to vector<8x64xbf16>
    %c0_12 = arith.constant 0 : index
    %c0_13 = arith.constant 0 : index
    %17 = vector.load %arg5[%c0_12, %c0_13] : memref<64x16xbf16, #tpu.memory_space<vmem>>, vector<64x16xbf16>
    %cst_14 = arith.constant dense<0.000000e+00> : vector<8x16xf32>
    %18 = tpu.matmul %16, %17, %cst_14 {dimension_numbers = #tpu.dot_dimension_numbers<[1], [0], [0], [1], [0, 0, 1, 1], [], []>} : vector<8x64xbf16>, vector<64x16xbf16>, vector<8x16xf32> -> vector<8x16xf32>
    %c0_15 = arith.constant 0 : index
    %c0_16 = arith.constant 0 : index
    %19 = vector.load %arg6[%c0_15, %c0_16] : memref<1x16xf32, #tpu.memory_space<vmem>>, vector<1x16xf32>
    %20 = vector.broadcast %19 : vector<1x16xf32> to vector<8x16xf32>
    %21 = arith.addf %18, %20 : vector<8x16xf32>
    %cst_17 = arith.constant 0.000000e+00 : f32
    %22 = vector.broadcast %cst_17 : f32 to vector<8x16xf32>
    %23 = arith.maximumf %21, %22 : vector<8x16xf32>
    %24 = math.absf %21 : vector<8x16xf32>
    %cst_18 = arith.constant 0.000000e+00 : f32
    %25 = vector.broadcast %cst_18 : f32 to vector<8x16xf32>
    %26 = arith.subf %25, %24 : vector<8x16xf32>
    %27 = math.exp %26 : vector<8x16xf32>
    %28 = math.log1p %27 : vector<8x16xf32>
    %29 = arith.addf %23, %28 : vector<8x16xf32>
    %cst_19 = arith.constant 9.99999997E-7 : f32
    %30 = vector.broadcast %cst_19 : f32 to vector<8x16xf32>
    %31 = arith.addf %29, %30 : vector<8x16xf32>
    %c0_20 = arith.constant 0 : index
    %c0_21 = arith.constant 0 : index
    %32 = vector.load %arg7[%c0_20, %c0_21] : memref<8x16xf32, #tpu.memory_space<vmem>>, vector<8x16xf32>
    tpu.vector_store %arg7[%c0_20, %c0_21], %31 {strides = array<i32>} : memref<8x16xf32, #tpu.memory_space<vmem>>, vector<8x16xf32>,
    return
  }
}

</mosaic_0001>

<llo_original>
// kernel: tpu_custom_call.1
$region0: #{tpu_custom_call.1}
  #allocation0 [shape = 'u32[]', space=smem, size = 0x4, offset = 0x4, fixed_abs, tag = 'smem constant byte address 0x4 - core index']
  #allocation1 [shape = 'u32[72,128]{1,0:T(1,128)}', space=vmem, size = 0x9000, scoped, tag = 'internal scratch']
  %s0 = inlined_call_operand.vmem [shape: bf16[8,2], index: 0, kind: input, shape index: {}]
  %s1 = inlined_call_operand.vmem [shape: bf16[2,64], index: 1, kind: input, shape index: {}]
  %s2 = inlined_call_operand.vmem [shape: f32[1,64], index: 2, kind: input, shape index: {}]
  %s3 = inlined_call_operand.vmem [shape: bf16[64,64], index: 3, kind: input, shape index: {}]
  %s4 = inlined_call_operand.vmem [shape: f32[1,64], index: 4, kind: input, shape index: {}]
  %s5 = inlined_call_operand.vmem [shape: bf16[64,16], index: 5, kind: input, shape index: {}]
  %s6 = inlined_call_operand.vmem [shape: f32[1,16], index: 6, kind: input, shape index: {}]
  %s7 = inlined_call_operand.hbm [shape: f32[8,16], index: 7, kind: output, shape index: {}]
  %s8 = sld [smem:[#allocation0]]
  $region38: #{tpu_custom_call.1} parent=0
    _
  %s10 = ssub.s32 1, %s8
  %s11 = scalar_select 0, %s10, %s8
  $region1: #{tpu_custom_call.1} parent=0
    #allocation2 [shape = 'u8[4096]{0}', space=vmem, size = 0x1000, scoped, tag = 'output window, operand 0, single buffered']
    #allocation3 [shape = 's32[1]{0}', space=sflag, size = 0x4, scoped, tag = 'scoped memory for tpu_custom_call.1']
    %12 = vsyncpa [#allocation3], 0
    // Predicated region
    $region2: #{tpu_custom_call.1} parent=1 // pred_check
      _
    $region3: #{tpu_custom_call.1} parent=1 // pred_check_branch
      %14 = sbr.rel (0) target = $region5
    $region4: #{tpu_custom_call.1} parent=1 // pred_region
      _
    $region5: #{tpu_custom_call.1} parent=1 // pred_fallthru
      _
    // Predicated region
    $region6: #{tpu_custom_call.1} parent=1 // pred_check
      _
    $region7: #{tpu_custom_call.1} parent=1 // pred_check_branch
      %16 = sbr.rel (0) target = $region9
    $region8: #{tpu_custom_call.1} parent=1 // pred_region
      _
    $region9: #{tpu_custom_call.1} parent=1 // pred_fallthru
      _
    // Predicated region
    $region10: #{tpu_custom_call.1} parent=1 // pred_check
      _
    $region11: #{tpu_custom_call.1} parent=1 // pred_check_branch
      %18 = sbr.rel (0) target = $region13
    $region12: #{tpu_custom_call.1} parent=1 // pred_region
      _
    $region13: #{tpu_custom_call.1} parent=1 // pred_fallthru
      _
    // Predicated region
    $region14: #{tpu_custom_call.1} parent=1 // pred_check
      _
    $region15: #{tpu_custom_call.1} parent=1 // pred_check_branch
      %20 = sbr.rel (0) target = $region17
    $region16: #{tpu_custom_call.1} parent=1 // pred_region
      _
    $region17: #{tpu_custom_call.1} parent=1 // pred_fallthru
      _
    // Predicated region
    $region18: #{tpu_custom_call.1} parent=1 // pred_check
      _
    $region19: #{tpu_custom_call.1} parent=1 // pred_check_branch
      %22 = sbr.rel (0) target = $region21
    $region20: #{tpu_custom_call.1} parent=1 // pred_region
      _
    $region21: #{tpu_custom_call.1} parent=1 // pred_fallthru
      _
    // Predicated region
    $region22: #{tpu_custom_call.1} parent=1 // pred_check
      _
    $region23: #{tpu_custom_call.1} parent=1 // pred_check_branch
      %24 = sbr.rel (0) target = $region25
    $region24: #{tpu_custom_call.1} parent=1 // pred_region
      _
    $region25: #{tpu_custom_call.1} parent=1 // pred_fallthru
      _
    // Predicated region
    $region26: #{tpu_custom_call.1} parent=1 // pred_check
      _
    $region27: #{tpu_custom_call.1} parent=1 // pred_check_branch
      %26 = sbr.rel (0) target = $region29
    $region28: #{tpu_custom_call.1} parent=1 // pred_region
      _
    $region29: #{tpu_custom_call.1} parent=1 // pred_fallthru
      _
    %v28 = vld [vmem:[%s0] sm:$0xf]
    %v29 = vld [vmem:[%s1] sm:$0x1]
    %v30 = vld [vmem:[%s2] sm:$0x1]
    %v32 = vperm.slane %v30, 0
    %vm34 = vcmask 15360
    %v36 = vsel %vm34, %v28, 0
    %vm38 = vcmask 1040384
    %v40 = vsel %vm38, %v29, 0
    %42 = vmatpush.bf16.msra.mxu0 0
    %43 = vmatpush.bf16.msra.mxu0 0
    %44 = vmatpush.bf16.msra.mxu0 0
    %45 = vmatpush.bf16.msra.mxu0 0
    %46 = vmatpush.bf16.msra.mxu0 0
    %47 = vmatpush.bf16.msra.mxu0 0
    %48 = vmatpush.bf16.msra.mxu0 0
    %49 = vmatpush.bf16.msra.mxu0 %v40
    %50 = vmatmul.bf16.gmra.mxu0 %v36
    %v51 = vpop.f32.mrf.mxu0
    %v52 = vadd.f32 %v32, %v51
    %v53 = vpop.f32.mrf.mxu0
    %54 = vdwg.mxu0
    %v55 = vmax.f32 %v52, 0.0
    %v56 = vpack.c.bf16 %v55, %v55
    %v57 = vld [vmem:[%s3] sm:$0xf]
    %v58 = vld [vmem:[%s3 + $0x4] sm:$0xf]
    %v59 = vld [vmem:[%s3 + $0x8] sm:$0xf]
    %v60 = vld [vmem:[%s3 + $0xc] sm:$0xf]
    %v61 = vld [vmem:[%s3 + $0x10] sm:$0xf]
    %v62 = vld [vmem:[%s3 + $0x14] sm:$0xf]
    %v63 = vld [vmem:[%s3 + $0x18] sm:$0xf]
    %v64 = vld [vmem:[%s3 + $0x1c] sm:$0xf]
    %v65 = vld [vmem:[%s4] sm:$0x1]
    %v67 = vperm.slane %v65, 0
    %v77 = vunpack.c.l.b16 %v57
    %v78 = vunpack.c.l.b16 %v58
    %v79 = vunpack.c.l.b16 %v59
    %v80 = vunpack.c.l.b16 %v60
    %v81 = vunpack.c.l.b16 %v61
    %v82 = vunpack.c.l.b16 %v62
    %v83 = vunpack.c.l.b16 %v63
    %v84 = vunpack.c.l.b16 %v64
    %v85 = vpack.c.b16 %v78, %v77
    %v86 = vpack.c.b16 %v80, %v79
    %v87 = vpack.c.b16 %v82, %v81
    %v88 = vpack.c.b16 %v84, %v83
    %vm93 = vcmask 523264
    %v95 = vsel %vm93, %v56, 0
    %97 = vmatpush.bf16.msra.mxu0 0
    %98 = vmatpush.bf16.msra.mxu0 0
    %99 = vmatpush.bf16.msra.mxu0 0
    %100 = vmatpush.bf16.msra.mxu0 0
    %101 = vmatpush.bf16.msra.mxu0 %v88
    %102 = vmatpush.bf16.msra.mxu0 %v87
    %103 = vmatpush.bf16.msra.mxu0 %v86
    %104 = vmatpush.bf16.msra.mxu0 %v85
    %105 = vmatmul.bf16.gmra.mxu0 %v95
    %v106 = vpop.f32.mrf.mxu0
    %v107 = vadd.f32 %v67, %v106
    %v108 = vpop.f32.mrf.mxu0
    %109 = vdwg.mxu0
    %v110 = vmax.f32 %v107, 0.0
    %v111 = vpack.c.bf16 %v110, %v110
    %v112 = vld [vmem:[%s5] sm:$0xf]
    %v113 = vld [vmem:[%s5 + $0x4] sm:$0xf]
    %v114 = vld [vmem:[%s5 + $0x8] sm:$0xf]
    %v115 = vld [vmem:[%s5 + $0xc] sm:$0xf]
    %v116 = vld [vmem:[%s5 + $0x10] sm:$0xf]
    %v117 = vld [vmem:[%s5 + $0x14] sm:$0xf]
    %v118 = vld [vmem:[%s5 + $0x18] sm:$0xf]
    %v119 = vld [vmem:[%s5 + $0x1c] sm:$0xf]
    %v120 = vld [vmem:[%s6] sm:$0x1]
    %v122 = vperm.slane %v120, 0
    %v132 = vunpack.c.l.b16 %v112
    %v133 = vunpack.c.l.b16 %v113
    %v134 = vunpack.c.l.b16 %v114
    %v135 = vunpack.c.l.b16 %v115
    %v136 = vunpack.c.l.b16 %v116
    %v137 = vunpack.c.l.b16 %v117
    %v138 = vunpack.c.l.b16 %v118
    %v139 = vunpack.c.l.b16 %v119
    %v140 = vpack.c.b16 %v133, %v132
    %v141 = vpack.c.b16 %v135, %v134
    %v142 = vpack.c.b16 %v137, %v136
    %v143 = vpack.c.b16 %v139, %v138
    %v149 = vsel %vm93, %v111, 0
    %151 = vmatpush.bf16.msra.mxu0 0
    %152 = vmatpush.bf16.msra.mxu0 0
    %153 = vmatpush.bf16.msra.mxu0 0
    %154 = vmatpush.bf16.msra.mxu0 0
    %155 = vmatpush.bf16.msra.mxu0 %v143
    %156 = vmatpush.bf16.msra.mxu0 %v142
    %157 = vmatpush.bf16.msra.mxu0 %v141
    %158 = vmatpush.bf16.msra.mxu0 %v140
    %159 = vmatmul.bf16.gmra.mxu0 %v149
    %v160 = vpop.f32.mrf.mxu0
    %v161 = vadd.f32 %v122, %v160
    %v162 = vpop.f32.mrf.mxu0
    %163 = vdwg.mxu0
    %v164 = vmax.f32 %v161, 0.0
    %v165 = vand.u32 2147483647, %v161
    %v166 = vsub.f32 0.0, %v165
    %v167 = vmul.f32 %v166, 1.442695
    %v168 = vpow.pop %v167
    %v169 = vadd.f32 %v168, 1.0
    %v170 = vlog2.pop %v169
    %v171 = vmul.f32 %v170, 0.6931472
    %v172 = vmul.f32 -0.5, %v168
    %v173 = vadd.f32 %v172, 1.0
    %v174 = vmul.f32 %v173, %v168
    %v175 = vand.u32 2147483647, %v168
    %vm176 = vcmp.lt.f32.partialorder %v175, 0.0004427343
    %v177 = vsel %vm176, %v174, %v171
    %v178 = vadd.f32 %v164, %v177
    %v179 = vadd.f32 %v178, 1e-06
    %vm180 = vcmask 130048
    %181 = vst.msk [vmem:[#allocation2] sm:$0xff] %vm180, %v179
    // Predicated region
    $region30: #{tpu_custom_call.1} parent=1 // pred_check
      _
    $region31: #{tpu_custom_call.1} parent=1 // pred_check_branch
      %183 = sbr.rel (0) target = $region33
    $region32: #{tpu_custom_call.1} parent=1 // pred_region
      %185 = vsyncadd [#allocation3], 0
      %s187 = sshll.u32 [#allocation2], 4
      %s188 = int_to_ptr.vmem [resolvable:$true] %s187
      %s189 = sshll.u32 %s7, 4
      %s190 = int_to_ptr.hbm [resolvable:$true] %s189
      %192 = dma.vmem_to_hbm [thread:$0]  %s188, 128, %s190, [#allocation3]
    $region33: #{tpu_custom_call.1} parent=1 // pred_fallthru
      _
    // Predicated region
    $region34: #{tpu_custom_call.1} parent=1 // pred_check
      _
    $region35: #{tpu_custom_call.1} parent=1 // pred_check_branch
      %194 = sbr.rel (0) target = $region37
    $region36: #{tpu_custom_call.1} parent=1 // pred_region
      %196 = dma.done [#allocation3], 128
    $region37: #{tpu_custom_call.1} parent=1 // pred_fallthru
      _
    %197 = vsyncpa [#allocation3], 1

</llo_original>
